<compile_context>
chip_gen: v7x
topology: tpu7x:2x2x1
jax: 0.10.0
libtpu: 0.0.40
codegen_flags: <defaults>
</compile_context>

<pallas_src>
import functools

import jax
import jax.numpy as jnp
from jax.experimental import pallas as pl
from jax.experimental.pallas import tpu as pltpu

IN_FEATURES = 2
OUT_FEATURES = 1
LANE = 128


def linear_kernel(params_ref, xt_ref, ot_ref):
    # params_ref: SMEM (3,)      -> [w0, w1, b] scalars
    # xt_ref:     VMEM (2, TB)   -> x transposed, batch on the lane axis
    # ot_ref:     VMEM (1, TB)   -> out transposed, lane-dense stores
    w0 = params_ref[0]
    w1 = params_ref[1]
    b = params_ref[2]
    ot_ref[...] = xt_ref[0:1, :] * w0 + xt_ref[1:2, :] * w1 + b


@functools.partial(jax.jit, static_argnames=())
def custom_model_forward(x, weight, bias):
    """Forward pass of CustomModel (nn.Linear(2, 1)).

    x:      (B, 2)  float32
    weight: (1, 2)  float32   (PyTorch layout: (out_features, in_features))
    bias:   (1,)    float32
    returns (B, 1)  float32
    """
    B, IN = x.shape
    assert IN == IN_FEATURES
    assert weight.shape == (OUT_FEATURES, IN_FEATURES)
    assert bias.shape == (OUT_FEATURES,)

    # Flatten weight + bias into a tiny SMEM scalar table: [w0, w1, b].
    params = jnp.concatenate(
        [weight.reshape(-1), bias.reshape(-1)]).astype(jnp.float32)

    # Put batch on the lane axis; pad to a multiple of the tile width.
    tb = 512 if B >= 512 else LANE
    b_pad = pl.cdiv(B, tb) * tb
    xt = jnp.pad(x.astype(jnp.float32).T, ((0, 0), (0, b_pad - B)))  # (2, B_pad)

    out_t = pl.pallas_call(
        linear_kernel,
        out_shape=jax.ShapeDtypeStruct((OUT_FEATURES, b_pad), jnp.float32),
        grid_spec=pl.GridSpec(
            grid=(b_pad // tb,),
            in_specs=[
                pl.BlockSpec(memory_space=pltpu.MemorySpace.SMEM),
                pl.BlockSpec((IN_FEATURES, tb), lambda i: (0, i)),
            ],
            out_specs=pl.BlockSpec((OUT_FEATURES, tb), lambda i: (0, i)),
        ),
        compiler_params=pltpu.CompilerParams(
            dimension_semantics=("parallel",),
        ),
    )(params, xt)

    # Strip padding, restore PyTorch (B, OUT) layout.
    return out_t[:, :B].T.astype(x.dtype)


if __name__ == "__main__":
    key = jax.random.PRNGKey(0)
    kx, kw, kb = jax.random.split(key, 3)

    # CustomModel.__init__: nn.Linear(2, 1) -> weight (1, 2), bias (1,)
    batch = 8
    x = jax.random.normal(kx, (batch, 2), dtype=jnp.float32)
    weight = jax.random.normal(kw, (1, 2), dtype=jnp.float32) * 0.5
    bias = jax.random.normal(kb, (1,), dtype=jnp.float32) * 0.1

    out = custom_model_forward(x, weight, bias)
    out = jax.block_until_ready(out)

    # reference check
    ref = x @ weight.T + bias
    assert out.shape == (batch, 1), f"bad shape {out.shape}"
    assert jnp.allclose(out, ref, atol=1e-5, rtol=1e-5), "mismatch vs reference"

    print("KERNEL_OK")
</pallas_src>

<mosaic_0001>
module attributes {stable_mosaic.version = 11 : i64} {
  func.func @linear_kernel(%arg0: i32, %arg1: memref<3xf32, #tpu.memory_space<smem>>, %arg2: memref<2x128xf32, #tpu.memory_space<vmem>>, %arg3: memref<1x128xf32, #tpu.memory_space<vmem>>) attributes {dimension_semantics = [#tpu.dimension_semantics<parallel>], iteration_bounds = array<i64: 1>, scalar_prefetch = 0 : i64, scratch_operands = 0 : i64, tpu.core_type = #tpu.core_type<tc>, window_params = [{transform_indices = @transform_0, window_bounds = array<i64: 3>}, {transform_indices = @transform_1, window_bounds = array<i64: 2, 128>}, {transform_indices = @transform_2, window_bounds = array<i64: 1, 128>}]} {
    %c0 = arith.constant 0 : index
    %0 = memref.load %arg1[%c0] : memref<3xf32, #tpu.memory_space<smem>>
    %c1 = arith.constant 1 : index
    %1 = memref.load %arg1[%c1] : memref<3xf32, #tpu.memory_space<smem>>
    %c2 = arith.constant 2 : index
    %2 = memref.load %arg1[%c2] : memref<3xf32, #tpu.memory_space<smem>>
    %c0_0 = arith.constant 0 : index
    %c0_1 = arith.constant 0 : index
    %3 = vector.load %arg2[%c0_0, %c0_1] : memref<2x128xf32, #tpu.memory_space<vmem>>, vector<1x128xf32>
    %4 = vector.broadcast %0 : f32 to vector<1x128xf32>
    %5 = arith.mulf %3, %4 : vector<1x128xf32>
    %c1_2 = arith.constant 1 : index
    %c0_3 = arith.constant 0 : index
    %6 = vector.load %arg2[%c1_2, %c0_3] : memref<2x128xf32, #tpu.memory_space<vmem>>, vector<1x128xf32>
    %7 = vector.broadcast %1 : f32 to vector<1x128xf32>
    %8 = arith.mulf %6, %7 : vector<1x128xf32>
    %9 = arith.addf %5, %8 : vector<1x128xf32>
    %10 = vector.broadcast %2 : f32 to vector<1x128xf32>
    %11 = arith.addf %9, %10 : vector<1x128xf32>
    %c0_4 = arith.constant 0 : index
    %c0_5 = arith.constant 0 : index
    %12 = vector.load %arg3[%c0_4, %c0_5] : memref<1x128xf32, #tpu.memory_space<vmem>>, vector<1x128xf32>
    tpu.vector_store %arg3[%c0_4, %c0_5], %11 {strides = array<i32>} : memref<1x128xf32, #tpu.memory_space<vmem>>, vector<1x128xf32>,
    return
  }
  func.func @transform_0(%arg0: i32) -> i32 {
    %c0_i32 = arith.constant 0 : i32
    %c0_i32_0 = arith.constant 0 : i32
    return %c0_i32 : i32
  }
  func.func @transform_1(%arg0: i32) -> (i32, i32) {
    %c0_i32 = arith.constant 0 : i32
    %c0_i32_0 = arith.constant 0 : i32
    return %c0_i32, %arg0 : i32, i32
  }
  func.func @transform_2(%arg0: i32) -> (i32, i32) {
    %c0_i32 = arith.constant 0 : i32
    %c0_i32_0 = arith.constant 0 : i32
    return %c0_i32, %arg0 : i32, i32
  }
}

</mosaic_0001>

<llo_original>
// kernel: custom_model_forward.1
$region0: #{custom_model_forward.1}
  #allocation0 [shape = 'u32[]', space=smem, size = 0x4, offset = 0x4, fixed_abs, tag = 'smem constant byte address 0x4 - core index']
  #allocation1 [shape = 'u32[144,128]{1,0:T(1,128)}', space=vmem, size = 0x12000, scoped, tag = 'internal scratch']
  %s0 = inlined_call_operand.vmem [shape: f32[3], index: 0, kind: input, shape index: {}]
  %s1 = inlined_call_operand.vmem [shape: f32[2,128], index: 1, kind: input, shape index: {}]
  %s2 = inlined_call_operand.vmem [shape: f32[1,128], index: 2, kind: output, shape index: {}]
  %s3 = sld [smem:[#allocation0]]
  $region22: #{custom_model_forward.1} parent=0
    _
  %s5 = ssub.s32 1, %s3
  %s6 = scalar_select 0, %s5, %s3
  $region1: #{custom_model_forward.1} parent=0
    #allocation2 [shape = 'u8[512]{0}', space=smem, size = 0x200, scoped, tag = 'input window, operand 0, single buffered']
    #allocation3 [shape = 's32[1]{0}', space=sflag, size = 0x4, scoped, tag = 'scoped memory for custom_model_forward.1']
    %7 = vsyncpa [#allocation3], 0
    // Predicated region
    $region2: #{custom_model_forward.1} parent=1 // pred_check
      _
    $region3: #{custom_model_forward.1} parent=1 // pred_check_branch
      %9 = sbr.rel (0) target = $region5
    $region4: #{custom_model_forward.1} parent=1 // pred_region
      %s11 = ssub.s32 16, 16
      %12 = vsyncadd [#allocation3], %s11
      %s14 = sshll.u32 %s0, 4
      %s15 = int_to_ptr.vmem [resolvable:$true] %s14
      %17 = dma.vmem_to_smem %s15, 16, [#allocation2], [#allocation3]
    $region5: #{custom_model_forward.1} parent=1 // pred_fallthru
      _
    // Predicated region
    $region6: #{custom_model_forward.1} parent=1 // pred_check
      _
    $region7: #{custom_model_forward.1} parent=1 // pred_check_branch
      %19 = sbr.rel (0) target = $region9
    $region8: #{custom_model_forward.1} parent=1 // pred_region
      _
    $region9: #{custom_model_forward.1} parent=1 // pred_fallthru
      _
    // Predicated region
    $region10: #{custom_model_forward.1} parent=1 // pred_check
      _
    $region11: #{custom_model_forward.1} parent=1 // pred_check_branch
      %21 = sbr.rel (0) target = $region13
    $region12: #{custom_model_forward.1} parent=1 // pred_region
      %22 = dma.done [#allocation3], 16
    $region13: #{custom_model_forward.1} parent=1 // pred_fallthru
      _
    %23 = sfence
    %s24 = sld [smem:[#allocation2]]
    %s25 = sld [smem:[#allocation2 + $0x1]]
    %s26 = sld [smem:[#allocation2 + $0x2]]
    %v27 = vld [vmem:[%s1] sm:$0x1]
    %v28 = vstv %s24
    %v29 = vmul.f32 %v27, %v28
    %v30 = vld [vmem:[%s1 + $0x1] sm:$0x1]
    %v31 = vstv %s25
    %v32 = vmul.f32 %v30, %v31
    %v33 = vadd.f32 %v29, %v32
    %v34 = vstv %s26
    %v35 = vadd.f32 %v33, %v34
    %36 = vst [vmem:[%s2] sm:$0x1] %v35
    // Predicated region
    $region14: #{custom_model_forward.1} parent=1 // pred_check
      _
    $region15: #{custom_model_forward.1} parent=1 // pred_check_branch
      %38 = sbr.rel (0) target = $region17
    $region16: #{custom_model_forward.1} parent=1 // pred_region
      _
    $region17: #{custom_model_forward.1} parent=1 // pred_fallthru
      _
    // Predicated region
    $region18: #{custom_model_forward.1} parent=1 // pred_check
      _
    $region19: #{custom_model_forward.1} parent=1 // pred_check_branch
      %40 = sbr.rel (0) target = $region21
    $region20: #{custom_model_forward.1} parent=1 // pred_region
      _
    $region21: #{custom_model_forward.1} parent=1 // pred_fallthru
      _
    %41 = vsyncpa [#allocation3], 1

</llo_original>
